<compile_context>
chip_gen: v7x
topology: tpu7x:2x2x1
jax: 0.10.0
libtpu: 0.0.40
codegen_flags: <defaults>
</compile_context>

<pallas_src>
import functools
import math

import jax
import jax.numpy as jnp
from jax import lax
from jax.experimental import pallas as pl
from jax.experimental.pallas import tpu as pltpu


# ----------------------------------------------------------------------------
# Synthetic config (mirrors the fields __init__ reads).
# ----------------------------------------------------------------------------
CONFIG = {
    "model_params": {"num_layers": 2, "decoder_layers": 1},
    "encoder_params": {
        "object_dims": 6,
        "n_embd": 32,
        "n_object_classes": 4,
        "object_level_max_route_length": 4,
        "object_level_max_num_objects": 4,
        "multiple_heads": False,   # single-head path implemented
        "object_dropout": 0.0,
    },
}


def _gelu_exact(x):
    # nn.GELU() default = exact erf formulation (lowers to a VALU polynomial).
    return 0.5 * x * (1.0 + lax.erf(x * (1.0 / math.sqrt(2.0))))


def _gelu_tanh(x):
    # tanh-approximate GELU: the transcendental goes to the (otherwise idle)
    # EUP slot, keeping the kernel DMA-bound at large tiles.
    c = math.sqrt(2.0 / math.pi)
    return 0.5 * x * (1.0 + jnp.tanh(c * (x + 0.044715 * (x * x * x))))


def _encoder_kernel(num_hidden, n_classes, n_embd, gelu_fn, *refs):
    # refs = (x, tid, w0, b0, ..., w_{H-1}, b_{H-1}, wf_pad, embf_pad, out)
    x_ref, tid_ref = refs[0], refs[1]
    out_ref = refs[-1]
    wb = refs[2:-1]

    # First Linear (normalization already folded into its weight/bias): the x
    # block is row-major (tile, D), so use the NT MXU form (contract the last
    # dims of both operands) and the result comes out feature-major
    # (out, tile) with rows on the lane axis -> lane-dense GELU / matmuls.
    def first_matmul(w_ref):
        return lax.dot_general(
            w_ref[...], x_ref[...], (((1,), (1,)), ((), ())),
            preferred_element_type=jnp.float32)

    if num_hidden > 0:
        h = gelu_fn(first_matmul(wb[0]) + wb[1][...])            # (E, tile)
        for i in range(1, num_hidden):
            h = gelu_fn(
                jnp.dot(wb[2 * i][...], h, preferred_element_type=jnp.float32)
                + wb[2 * i + 1][...])
        proj = jnp.dot(wb[2 * num_hidden][...], h,
                       preferred_element_type=jnp.float32)       # (EP, tile)
    else:
        proj = first_matmul(wb[0])                               # (EP, tile)

    # Embedding add (final bias folded into the table at trace time) as a
    # one-hot outer-product matmul: N = tile is lane-dense, MXU has slack.
    embf = wb[-1][...]                                           # (EP, C)
    tid = tid_ref[...]                                           # (1, tile)
    classes = lax.broadcasted_iota(jnp.int32, (n_classes, tid.shape[1]), 0)
    onehot = (classes == tid).astype(jnp.float32)                # (C, tile)
    proj = proj + jnp.dot(embf, onehot, preferred_element_type=jnp.float32)

    # (EP, tile) -> (tile, EP) in-kernel transpose (EP is a multiple of 128 so
    # both orientations are natively (8,128)-tiled), slice the real features
    # and store the row-major output block -> no host-side transpose pass.
    out_ref[...] = jnp.transpose(proj, (1, 0))[:, :n_embd].astype(out_ref.dtype)


def object_level_bev_encode(x, type_ids, params, *, tile_m=4096,
                            out_dtype=jnp.float32, gelu="tanh"):
    """x: (..., object_dims) float, type_ids: (...) int -> (..., n_embd)."""
    mean = params["mean"].astype(jnp.float32)
    std = params["std"].astype(jnp.float32)
    ws = [w.astype(jnp.float32) for w in params["weights"]]   # each (out, in)
    bs = [b.astype(jnp.float32) for b in params["biases"]]
    emb = params["embedding"].astype(jnp.float32)             # (C, E)

    lead = x.shape[:-1]
    D = x.shape[-1]
    C, E = emb.shape
    L = len(ws) - 1                                           # hidden layers

    # Fold (x - mean)/std into the first Linear (trace-time constant fold).
    inv_std = 1.0 / std
    w0_orig = ws[0]
    ws = [w0_orig * inv_std[None, :]] + ws[1:]
    bs = [bs[0] - w0_orig @ (mean * inv_std)] + bs[1:]

    # Fold the final bias into the embedding table (every row receives exactly
    # one class row), and zero-pad the final weight / table to EP=128 rows so
    # the in-kernel (EP, tile) -> (tile, EP) transpose is tile-aligned.
    EP = max(128, pl.cdiv(E, 128) * 128)
    wf, bf = ws[-1], bs[-1]
    emb_eff_t = (emb + bf[None, :]).T                         # (E, C)
    wf_pad = jnp.zeros((EP, wf.shape[1]), jnp.float32).at[:E, :].set(wf)
    embf_pad = jnp.zeros((EP, C), jnp.float32).at[:E, :].set(emb_eff_t)

    M = int(math.prod(lead)) if lead else 1
    x2 = x.reshape(M, D).astype(jnp.float32)                  # free, row-major
    tid = type_ids.reshape(1, M).astype(jnp.int32)            # free

    # Row tile: multiple of 128, big enough to amortize the fixed per-step
    # overhead, clamped so tiny inputs are not grossly over-padded.
    tile = min(max(128, (tile_m // 128) * 128), pl.cdiv(M, 128) * 128)
    grid = pl.cdiv(M, tile)        # ragged tail handled by Pallas (no jnp.pad)

    def resident(a):
        return pl.BlockSpec(a.shape, lambda i: (0, 0))        # stays in VMEM

    in_specs = [
        pl.BlockSpec((tile, D), lambda i: (i, 0)),            # x, natural layout
        pl.BlockSpec((1, tile), lambda i: (0, i)),            # type ids
    ]
    args = [x2, tid]
    for l in range(L):
        w, b = ws[l], bs[l].reshape(-1, 1)
        in_specs += [resident(w), resident(b)]
        args += [w, b]
    in_specs += [resident(wf_pad), resident(embf_pad)]
    args += [wf_pad, embf_pad]

    gelu_fn = _gelu_tanh if gelu == "tanh" else _gelu_exact
    kernel = functools.partial(_encoder_kernel, L, C, E, gelu_fn)

    out = pl.pallas_call(
        kernel,
        out_shape=jax.ShapeDtypeStruct((M, E), out_dtype),
        grid=(grid,),
        in_specs=in_specs,
        out_specs=pl.BlockSpec((tile, E), lambda i: (i, 0)),
        compiler_params=pltpu.CompilerParams(
            dimension_semantics=("parallel",),
            vmem_limit_bytes=32 * 1024 * 1024),
    )(*args)

    # Output is already row-major (M, E): reshape is free (no HBM pass).
    return out.reshape(*lead, E)


def init_params(key, config):
    ep = config["encoder_params"]
    D, E, C = ep["object_dims"], ep["n_embd"], ep["n_object_classes"]
    num_layers = config["model_params"]["num_layers"]

    dims = []   # (out, in), same convention as nn.Linear.weight
    in_dim = D
    for _ in range(num_layers):
        dims.append((E, in_dim))
        in_dim = E
    dims.append((E, E))  # final (single-head) linear

    keys = jax.random.split(key, 2 * len(dims) + 3)
    weights, biases = [], []
    for i, (dout, din) in enumerate(dims):
        bound = 1.0 / math.sqrt(din)
        w = jax.random.uniform(keys[2 * i], (dout, din), jnp.float32, -bound, bound)
        b = jax.random.uniform(keys[2 * i + 1], (dout,), jnp.float32, -bound, bound)
        weights.append(w)
        biases.append(b)

    emb = jax.random.normal(keys[-3], (C, E), jnp.float32)
    mean = jax.random.normal(keys[-2], (D,), jnp.float32) * 0.1
    std = jax.random.uniform(keys[-1], (D,), jnp.float32, 0.5, 1.5)
    return {"weights": weights, "biases": biases, "embedding": emb,
            "mean": mean, "std": std}


def reference_encode(x, type_ids, params, gelu="tanh"):
    act = _gelu_tanh if gelu == "tanh" else _gelu_exact
    hp = lax.Precision.HIGHEST
    h = (x - params["mean"]) / params["std"]
    ws, bs = params["weights"], params["biases"]
    for w, b in zip(ws[:-1], bs[:-1]):
        h = act(jnp.matmul(h, w.T, precision=hp) + b)
    proj = jnp.matmul(h, ws[-1].T, precision=hp) + bs[-1]
    return proj + params["embedding"][type_ids]


if __name__ == "__main__":
    key = jax.random.PRNGKey(0)
    kp, kx, kt, kx2, kt2 = jax.random.split(key, 5)

    ep = CONFIG["encoder_params"]
    D = ep["object_dims"]
    C = ep["n_object_classes"]
    E = ep["n_embd"]
    N = ep["object_level_max_route_length"] + ep["object_level_max_num_objects"]  # 8

    params = init_params(kp, CONFIG)

    # 1) Small BxTxNxD case with exact-erf GELU (nn.GELU() numerics) and a
    #    single ragged block (M = 32 < tile).
    B, T = 2, 2
    x = jax.random.normal(kx, (B, T, N, D), jnp.float32)
    type_ids = jax.random.randint(kt, (B, T, N), 0, C, jnp.int32)
    out = jax.block_until_ready(
        object_level_bev_encode(x, type_ids, params, gelu="exact"))
    ref = reference_encode(x, type_ids, params, gelu="exact")
    assert out.shape == (B, T, N, E)
    assert jnp.allclose(out, ref, atol=1e-4, rtol=1e-4)

    # 2) Multi-grid-step case with a ragged tail (M = 2560, tile = 1024 -> 3
    #    steps), default tanh-approx GELU (the performance configuration).
    B2, T2 = 2, 160
    x2 = jax.random.normal(kx2, (B2, T2, N, D), jnp.float32)
    tids2 = jax.random.randint(kt2, (B2, T2, N), 0, C, jnp.int32)
    out2 = jax.block_until_ready(
        object_level_bev_encode(x2, tids2, params, tile_m=1024))
    ref2 = reference_encode(x2, tids2, params, gelu="tanh")
    assert out2.shape == (B2, T2, N, E)
    assert jnp.allclose(out2, ref2, atol=1e-4, rtol=1e-4)

    # TODO(synk): multiple_heads=True branch (per-class projection heads +
    # gather) not wired; the module default is multiple_heads=False which is
    # what this kernel implements.
    print("KERNEL_OK")
</pallas_src>

<mosaic_0001>
module attributes {stable_mosaic.version = 11 : i64} {
  func.func @_encoder_kernel(%arg0: i32, %arg1: memref<128x6xf32, #tpu.memory_space<vmem>>, %arg2: memref<1x128xi32, #tpu.memory_space<vmem>>, %arg3: memref<32x6xf32, #tpu.memory_space<vmem>>, %arg4: memref<32x1xf32, #tpu.memory_space<vmem>>, %arg5: memref<32x32xf32, #tpu.memory_space<vmem>>, %arg6: memref<32x1xf32, #tpu.memory_space<vmem>>, %arg7: memref<128x32xf32, #tpu.memory_space<vmem>>, %arg8: memref<128x4xf32, #tpu.memory_space<vmem>>, %arg9: memref<128x32xf32, #tpu.memory_space<vmem>>) attributes {dimension_semantics = [#tpu.dimension_semantics<parallel>], iteration_bounds = array<i64: 1>, scalar_prefetch = 0 : i64, scratch_operands = 0 : i64, tpu.core_type = #tpu.core_type<tc>, window_params = [{transform_indices = @transform_0, window_bounds = array<i64: 128, 6>}, {transform_indices = @transform_1, window_bounds = array<i64: 1, 128>}, {pipeline_mode = #tpu.pipeline_mode<synchronous>, transform_indices = @transform_2, window_bounds = array<i64: 32, 6>}, {pipeline_mode = #tpu.pipeline_mode<synchronous>, transform_indices = @transform_3, window_bounds = array<i64: 32, 1>}, {pipeline_mode = #tpu.pipeline_mode<synchronous>, transform_indices = @transform_4, window_bounds = array<i64: 32, 32>}, {pipeline_mode = #tpu.pipeline_mode<synchronous>, transform_indices = @transform_5, window_bounds = array<i64: 32, 1>}, {pipeline_mode = #tpu.pipeline_mode<synchronous>, transform_indices = @transform_6, window_bounds = array<i64: 128, 32>}, {pipeline_mode = #tpu.pipeline_mode<synchronous>, transform_indices = @transform_7, window_bounds = array<i64: 128, 4>}, {transform_indices = @transform_8, window_bounds = array<i64: 128, 32>}]} {
    %c0 = arith.constant 0 : index
    %c0_0 = arith.constant 0 : index
    %0 = vector.load %arg3[%c0, %c0_0] : memref<32x6xf32, #tpu.memory_space<vmem>>, vector<32x6xf32>
    %c0_1 = arith.constant 0 : index
    %c0_2 = arith.constant 0 : index
    %1 = vector.load %arg1[%c0_1, %c0_2] : memref<128x6xf32, #tpu.memory_space<vmem>>, vector<128x6xf32>
    %cst = arith.constant dense<0.000000e+00> : vector<32x128xf32>
    %2 = tpu.matmul %0, %1, %cst {dimension_numbers = #tpu.dot_dimension_numbers<[1], [1], [0], [0], [0, 0, 1, 0], [], []>} : vector<32x6xf32>, vector<128x6xf32>, vector<32x128xf32> -> vector<32x128xf32>
    %c0_3 = arith.constant 0 : index
    %c0_4 = arith.constant 0 : index
    %3 = vector.load %arg4[%c0_3, %c0_4] : memref<32x1xf32, #tpu.memory_space<vmem>>, vector<32x1xf32>
    %4 = vector.broadcast %3 : vector<32x1xf32> to vector<32x128xf32>
    %5 = arith.addf %2, %4 : vector<32x128xf32>
    %cst_5 = arith.constant 5.000000e-01 : f32
    %6 = vector.broadcast %cst_5 : f32 to vector<32x128xf32>
    %7 = arith.mulf %6, %5 : vector<32x128xf32>
    %cst_6 = arith.constant 0.707106769 : f32
    %8 = vector.broadcast %cst_6 : f32 to vector<32x128xf32>
    %9 = arith.mulf %5, %8 : vector<32x128xf32>
    %10 = math.erf %9 : vector<32x128xf32>
    %cst_7 = arith.constant 1.000000e+00 : f32
    %11 = vector.broadcast %cst_7 : f32 to vector<32x128xf32>
    %12 = arith.addf %11, %10 : vector<32x128xf32>
    %13 = arith.mulf %7, %12 : vector<32x128xf32>
    %c0_8 = arith.constant 0 : index
    %c0_9 = arith.constant 0 : index
    %14 = vector.load %arg5[%c0_8, %c0_9] : memref<32x32xf32, #tpu.memory_space<vmem>>, vector<32x32xf32>
    %cst_10 = arith.constant dense<0.000000e+00> : vector<32x128xf32>
    %15 = tpu.matmul %14, %13, %cst_10 {dimension_numbers = #tpu.dot_dimension_numbers<[1], [0], [0], [1], [0, 0, 1, 1], [], []>} : vector<32x32xf32>, vector<32x128xf32>, vector<32x128xf32> -> vector<32x128xf32>
    %c0_11 = arith.constant 0 : index
    %c0_12 = arith.constant 0 : index
    %16 = vector.load %arg6[%c0_11, %c0_12] : memref<32x1xf32, #tpu.memory_space<vmem>>, vector<32x1xf32>
    %17 = vector.broadcast %16 : vector<32x1xf32> to vector<32x128xf32>
    %18 = arith.addf %15, %17 : vector<32x128xf32>
    %cst_13 = arith.constant 5.000000e-01 : f32
    %19 = vector.broadcast %cst_13 : f32 to vector<32x128xf32>
    %20 = arith.mulf %19, %18 : vector<32x128xf32>
    %cst_14 = arith.constant 0.707106769 : f32
    %21 = vector.broadcast %cst_14 : f32 to vector<32x128xf32>
    %22 = arith.mulf %18, %21 : vector<32x128xf32>
    %23 = math.erf %22 : vector<32x128xf32>
    %cst_15 = arith.constant 1.000000e+00 : f32
    %24 = vector.broadcast %cst_15 : f32 to vector<32x128xf32>
    %25 = arith.addf %24, %23 : vector<32x128xf32>
    %26 = arith.mulf %20, %25 : vector<32x128xf32>
    %c0_16 = arith.constant 0 : index
    %c0_17 = arith.constant 0 : index
    %27 = vector.load %arg7[%c0_16, %c0_17] : memref<128x32xf32, #tpu.memory_space<vmem>>, vector<128x32xf32>
    %cst_18 = arith.constant dense<0.000000e+00> : vector<128x128xf32>
    %28 = tpu.matmul %27, %26, %cst_18 {dimension_numbers = #tpu.dot_dimension_numbers<[1], [0], [0], [1], [0, 0, 1, 1], [], []>} : vector<128x32xf32>, vector<32x128xf32>, vector<128x128xf32> -> vector<128x128xf32>
    %c0_19 = arith.constant 0 : index
    %c0_20 = arith.constant 0 : index
    %29 = vector.load %arg8[%c0_19, %c0_20] : memref<128x4xf32, #tpu.memory_space<vmem>>, vector<128x4xf32>
    %c0_21 = arith.constant 0 : index
    %c0_22 = arith.constant 0 : index
    %30 = vector.load %arg2[%c0_21, %c0_22] : memref<1x128xi32, #tpu.memory_space<vmem>>, vector<1x128xi32>
    %31 = tpu.iota {dimensions = array<i32: 0>} : vector<4x128xi32>
    %32 = vector.broadcast %30 : vector<1x128xi32> to vector<4x128xi32>
    %33 = arith.cmpi eq, %31, %32 : vector<4x128xi32>
    %34 = arith.extui %33 : vector<4x128xi1> to vector<4x128xi32>
    %35 = arith.sitofp %34 : vector<4x128xi32> to vector<4x128xf32>
    %cst_23 = arith.constant dense<0.000000e+00> : vector<128x128xf32>
    %36 = tpu.matmul %29, %35, %cst_23 {dimension_numbers = #tpu.dot_dimension_numbers<[1], [0], [0], [1], [0, 0, 1, 1], [], []>} : vector<128x4xf32>, vector<4x128xf32>, vector<128x128xf32> -> vector<128x128xf32>
    %37 = arith.addf %28, %36 : vector<128x128xf32>
    %38 = tpu.transpose %37, [1, 0] : vector<128x128xf32> -> vector<128x128xf32>
    %39 = vector.extract_strided_slice %38 {offsets = [0, 0], sizes = [128, 32], strides = [1, 1]} : vector<128x128xf32> to vector<128x32xf32>
    %c0_24 = arith.constant 0 : index
    %c0_25 = arith.constant 0 : index
    %40 = vector.load %arg9[%c0_24, %c0_25] : memref<128x32xf32, #tpu.memory_space<vmem>>, vector<128x32xf32>
    tpu.vector_store %arg9[%c0_24, %c0_25], %39 {strides = array<i32>} : memref<128x32xf32, #tpu.memory_space<vmem>>, vector<128x32xf32>,
    return
  }
  func.func @transform_0(%arg0: i32) -> (i32, i32) {
    %c0_i32 = arith.constant 0 : i32
    %c0_i32_0 = arith.constant 0 : i32
    return %arg0, %c0_i32 : i32, i32
  }
  func.func @transform_1(%arg0: i32) -> (i32, i32) {
    %c0_i32 = arith.constant 0 : i32
    %c0_i32_0 = arith.constant 0 : i32
    return %c0_i32, %arg0 : i32, i32
  }
  func.func @transform_2(%arg0: i32) -> (i32, i32) {
    %c0_i32 = arith.constant 0 : i32
    %c0_i32_0 = arith.constant 0 : i32
    %c0_i32_1 = arith.constant 0 : i32
    return %c0_i32, %c0_i32_0 : i32, i32
  }
  func.func @transform_3(%arg0: i32) -> (i32, i32) {
    %c0_i32 = arith.constant 0 : i32
    %c0_i32_0 = arith.constant 0 : i32
    %c0_i32_1 = arith.constant 0 : i32
    return %c0_i32, %c0_i32_0 : i32, i32
  }
  func.func @transform_4(%arg0: i32) -> (i32, i32) {
    %c0_i32 = arith.constant 0 : i32
    %c0_i32_0 = arith.constant 0 : i32
    %c0_i32_1 = arith.constant 0 : i32
    return %c0_i32, %c0_i32_0 : i32, i32
  }
  func.func @transform_5(%arg0: i32) -> (i32, i32) {
    %c0_i32 = arith.constant 0 : i32
    %c0_i32_0 = arith.constant 0 : i32
    %c0_i32_1 = arith.constant 0 : i32
    return %c0_i32, %c0_i32_0 : i32, i32
  }
  func.func @transform_6(%arg0: i32) -> (i32, i32) {
    %c0_i32 = arith.constant 0 : i32
    %c0_i32_0 = arith.constant 0 : i32
    %c0_i32_1 = arith.constant 0 : i32
    return %c0_i32, %c0_i32_0 : i32, i32
  }
  func.func @transform_7(%arg0: i32) -> (i32, i32) {
    %c0_i32 = arith.constant 0 : i32
    %c0_i32_0 = arith.constant 0 : i32
    %c0_i32_1 = arith.constant 0 : i32
    return %c0_i32, %c0_i32_0 : i32, i32
  }
  func.func @transform_8(%arg0: i32) -> (i32, i32) {
    %c0_i32 = arith.constant 0 : i32
    %c0_i32_0 = arith.constant 0 : i32
    return %arg0, %c0_i32 : i32, i32
  }
}

</mosaic_0001>

<llo_original>
// kernel: tpu_custom_call.1
$region0: #{tpu_custom_call.1}
  #allocation0 [shape = 'u32[]', space=smem, size = 0x4, offset = 0x4, fixed_abs, tag = 'smem constant byte address 0x4 - core index']
  #allocation1 [shape = 'u32[144,128]{1,0:T(1,128)}', space=vmem, size = 0x12000, scoped, tag = 'internal scratch']
  %s0 = inlined_call_operand.vmem [shape: f32[32,6], index: 0, kind: input, shape index: {}]
  %s1 = inlined_call_operand.vmem [shape: s32[1,32], index: 1, kind: input, shape index: {}]
  %s2 = inlined_call_operand.vmem [shape: f32[32,6], index: 2, kind: input, shape index: {}]
  %s3 = inlined_call_operand.vmem [shape: f32[32,1], index: 3, kind: input, shape index: {}]
  %s4 = inlined_call_operand.vmem [shape: f32[32,32], index: 4, kind: input, shape index: {}]
  %s5 = inlined_call_operand.vmem [shape: f32[32,1], index: 5, kind: input, shape index: {}]
  %s6 = inlined_call_operand.vmem [shape: f32[128,32], index: 6, kind: input, shape index: {}]
  %s7 = inlined_call_operand.vmem [shape: f32[128,4], index: 7, kind: input, shape index: {}]
  %s8 = inlined_call_operand.hbm [shape: f32[32,32], index: 8, kind: output, shape index: {}]
  %s9 = sld [smem:[#allocation0]]
  $region42: #{tpu_custom_call.1} parent=0
    _
  %s11 = ssub.s32 1, %s9
  %s12 = scalar_select 0, %s11, %s9
  $region1: #{tpu_custom_call.1} parent=0
    #allocation2 [shape = 'u8[65536]{0}', space=vmem, size = 0x10000, scoped, tag = 'output window, operand 0, single buffered']
    #allocation3 [shape = 's32[1]{0}', space=sflag, size = 0x4, scoped, tag = 'scoped memory for tpu_custom_call.1']
    %13 = vsyncpa [#allocation3], 0
    // Predicated region
    $region2: #{tpu_custom_call.1} parent=1 // pred_check
      _
    $region3: #{tpu_custom_call.1} parent=1 // pred_check_branch
      %15 = sbr.rel (0) target = $region5
    $region4: #{tpu_custom_call.1} parent=1 // pred_region
      _
    $region5: #{tpu_custom_call.1} parent=1 // pred_fallthru
      _
    // Predicated region
    $region6: #{tpu_custom_call.1} parent=1 // pred_check
      _
    $region7: #{tpu_custom_call.1} parent=1 // pred_check_branch
      %17 = sbr.rel (0) target = $region9
    $region8: #{tpu_custom_call.1} parent=1 // pred_region
      _
    $region9: #{tpu_custom_call.1} parent=1 // pred_fallthru
      _
    // Predicated region
    $region10: #{tpu_custom_call.1} parent=1 // pred_check
      _
    $region11: #{tpu_custom_call.1} parent=1 // pred_check_branch
      %19 = sbr.rel (0) target = $region13
    $region12: #{tpu_custom_call.1} parent=1 // pred_region
      _
    $region13: #{tpu_custom_call.1} parent=1 // pred_fallthru
      _
    // Predicated region
    $region14: #{tpu_custom_call.1} parent=1 // pred_check
      _
    $region15: #{tpu_custom_call.1} parent=1 // pred_check_branch
      %21 = sbr.rel (0) target = $region17
    $region16: #{tpu_custom_call.1} parent=1 // pred_region
      _
    $region17: #{tpu_custom_call.1} parent=1 // pred_fallthru
      _
    // Predicated region
    $region18: #{tpu_custom_call.1} parent=1 // pred_check
      _
    $region19: #{tpu_custom_call.1} parent=1 // pred_check_branch
      %23 = sbr.rel (0) target = $region21
    $region20: #{tpu_custom_call.1} parent=1 // pred_region
      _
    $region21: #{tpu_custom_call.1} parent=1 // pred_fallthru
      _
    // Predicated region
    $region22: #{tpu_custom_call.1} parent=1 // pred_check
      _
    $region23: #{tpu_custom_call.1} parent=1 // pred_check_branch
      %25 = sbr.rel (0) target = $region25
    $region24: #{tpu_custom_call.1} parent=1 // pred_region
      _
    $region25: #{tpu_custom_call.1} parent=1 // pred_fallthru
      _
    // Predicated region
    $region26: #{tpu_custom_call.1} parent=1 // pred_check
      _
    $region27: #{tpu_custom_call.1} parent=1 // pred_check_branch
      %27 = sbr.rel (0) target = $region29
    $region28: #{tpu_custom_call.1} parent=1 // pred_region
      _
    $region29: #{tpu_custom_call.1} parent=1 // pred_fallthru
      _
    // Predicated region
    $region30: #{tpu_custom_call.1} parent=1 // pred_check
      _
    $region31: #{tpu_custom_call.1} parent=1 // pred_check_branch
      %29 = sbr.rel (0) target = $region33
    $region32: #{tpu_custom_call.1} parent=1 // pred_region
      _
    $region33: #{tpu_custom_call.1} parent=1 // pred_fallthru
      _
    %v30 = vld [vmem:[%s2] sm:$0xff]
    %v31 = vld [vmem:[%s2 + $0x8] sm:$0xff]
    %v32 = vld [vmem:[%s2 + $0x10] sm:$0xff]
    %v33 = vld [vmem:[%s2 + $0x18] sm:$0xff]
    %v34 = vld [vmem:[%s0] sm:$0xff]
    %v35 = vld [vmem:[%s0 + $0x8] sm:$0xff]
    %v36 = vld [vmem:[%s0 + $0x10] sm:$0xff]
    %v37 = vld [vmem:[%s0 + $0x18] sm:$0xff]
    %v38 = vld [vmem:[%s0 + $0x20] sm:$0xff]
    %v39 = vld [vmem:[%s0 + $0x28] sm:$0xff]
    %v40 = vld [vmem:[%s0 + $0x30] sm:$0xff]
    %v41 = vld [vmem:[%s0 + $0x38] sm:$0xff]
    %v42 = vld [vmem:[%s0 + $0x40] sm:$0xff]
    %v43 = vld [vmem:[%s0 + $0x48] sm:$0xff]
    %v44 = vld [vmem:[%s0 + $0x50] sm:$0xff]
    %v45 = vld [vmem:[%s0 + $0x58] sm:$0xff]
    %v46 = vld [vmem:[%s0 + $0x60] sm:$0xff]
    %v47 = vld [vmem:[%s0 + $0x68] sm:$0xff]
    %v48 = vld [vmem:[%s0 + $0x70] sm:$0xff]
    %v49 = vld [vmem:[%s0 + $0x78] sm:$0xff]
    %v50 = vld [vmem:[%s3] sm:$0xff]
    %v51 = vld [vmem:[%s3 + $0x8] sm:$0xff]
    %v52 = vld [vmem:[%s3 + $0x10] sm:$0xff]
    %v53 = vld [vmem:[%s3 + $0x18] sm:$0xff]
    %55 = vset.pattern.permute.xlu0 0
    %56 = vperm.xlu0 %55, %v50
    %v57 = vpop.permute.xlu0 %56
    %60 = vset.pattern.permute.xlu0 0
    %61 = vperm.xlu0 %60, %v51
    %v62 = vpop.permute.xlu0 %61
    %65 = vset.pattern.permute.xlu0 0
    %66 = vperm.xlu0 %65, %v52
    %v67 = vpop.permute.xlu0 %66
    %70 = vset.pattern.permute.xlu0 0
    %71 = vperm.xlu0 %70, %v53
    %v72 = vpop.permute.xlu0 %71
    %vm74 = vcmask 48128
    %v76 = vsel %vm74, %v30, 0
    %v79 = vsel %vm74, %v31, 0
    %v82 = vsel %vm74, %v32, 0
    %v85 = vsel %vm74, %v33, 0
    %v88 = vsel %vm74, %v34, 0
    %v91 = vsel %vm74, %v35, 0
    %v94 = vsel %vm74, %v36, 0
    %v97 = vsel %vm74, %v37, 0
    %v100 = vsel %vm74, %v38, 0
    %v103 = vsel %vm74, %v39, 0
    %v106 = vsel %vm74, %v40, 0
    %v109 = vsel %vm74, %v41, 0
    %v112 = vsel %vm74, %v42, 0
    %v115 = vsel %vm74, %v43, 0
    %v118 = vsel %vm74, %v44, 0
    %v121 = vsel %vm74, %v45, 0
    %v124 = vsel %vm74, %v46, 0
    %v127 = vsel %vm74, %v47, 0
    %v130 = vsel %vm74, %v48, 0
    %v133 = vsel %vm74, %v49, 0
    %135 = vmatprep.subr.mxu0 0.0
    %136 = vmatpush1.xpose.msra.mxu0 %v88
    %137 = vmatprep.subr.mxu0 0.0
    %138 = vmatpush1.xpose.msra.mxu0 %v91
    %139 = vmatprep.subr.mxu0 0.0
    %140 = vmatpush1.xpose.msra.mxu0 %v94
    %141 = vmatprep.subr.mxu0 0.0
    %142 = vmatpush1.xpose.msra.mxu0 %v97
    %143 = vmatprep.subr.mxu0 0.0
    %144 = vmatpush1.xpose.msra.mxu0 %v100
    %145 = vmatprep.subr.mxu0 0.0
    %146 = vmatpush1.xpose.msra.mxu0 %v103
    %147 = vmatprep.subr.mxu0 0.0
    %148 = vmatpush1.xpose.msra.mxu0 %v106
    %149 = vmatprep.subr.mxu0 0.0
    %150 = vmatpush1.xpose.msra.mxu0 %v109
    %151 = vmatprep.subr.mxu0 0.0
    %152 = vmatpush1.xpose.msra.mxu0 %v112
    %153 = vmatprep.subr.mxu0 0.0
    %154 = vmatpush1.xpose.msra.mxu0 %v115
    %155 = vmatprep.subr.mxu0 0.0
    %156 = vmatpush1.xpose.msra.mxu0 %v118
    %157 = vmatprep.subr.mxu0 0.0
    %158 = vmatpush1.xpose.msra.mxu0 %v121
    %159 = vmatprep.subr.mxu0 0.0
    %160 = vmatpush1.xpose.msra.mxu0 %v124
    %161 = vmatprep.subr.mxu0 0.0
    %162 = vmatpush1.xpose.msra.mxu0 %v127
    %163 = vmatprep.subr.mxu0 0.0
    %164 = vmatpush1.xpose.msra.mxu0 %v130
    %165 = vmatprep.subr.mxu0 0.0
    %166 = vmatpush1.xpose.msra.mxu0 %v133
    %167 = vmatprep.subr.mxu0 0.0
    %168 = vmatpush1.xpose.msra.mxu0 0.0
    %169 = vmatprep.subr.mxu0 0.0
    %170 = vmatpush1.xpose.msra.mxu0 0.0
    %171 = vmatprep.subr.mxu0 0.0
    %172 = vmatpush1.xpose.msra.mxu0 0.0
    %173 = vmatprep.subr.mxu0 0.0
    %174 = vmatpush1.xpose.msra.mxu0 0.0
    %175 = vmatprep.subr.mxu0 0.0
    %176 = vmatpush1.xpose.msra.mxu0 0.0
    %177 = vmatprep.subr.mxu0 0.0
    %178 = vmatpush1.xpose.msra.mxu0 0.0
    %179 = vmatprep.subr.mxu0 0.0
    %180 = vmatpush1.xpose.msra.mxu0 0.0
    %181 = vmatprep.subr.mxu0 0.0
    %182 = vmatpush1.xpose.msra.mxu0 0.0
    %183 = vmatprep.subr.mxu0 0.0
    %184 = vmatpush1.xpose.msra.mxu0 0.0
    %185 = vmatprep.subr.mxu0 0.0
    %186 = vmatpush1.xpose.msra.mxu0 0.0
    %187 = vmatprep.subr.mxu0 0.0
    %188 = vmatpush1.xpose.msra.mxu0 0.0
    %189 = vmatprep.subr.mxu0 0.0
    %190 = vmatpush1.xpose.msra.mxu0 0.0
    %191 = vmatprep.subr.mxu0 0.0
    %192 = vmatpush1.xpose.msra.mxu0 0.0
    %193 = vmatprep.subr.mxu0 0.0
    %194 = vmatpush1.xpose.msra.mxu0 0.0
    %195 = vmatprep.subr.mxu0 0.0
    %196 = vmatpush1.xpose.msra.mxu0 0.0
    %197 = vmatprep.subr.mxu0 0.0
    %198 = vmatpush1.xpose.msra.mxu0 0.0
    %199 = vmatprep.mubr.f32.mxu0 0.0
    %200 = vmatmul.mubr.f32.gmra.mrb[0].mxu0 %v76
    %v201 = vpop.f32.mrb[0].mxu0
    %v202 = vadd.f32 %v57, %v201
    %v203 = vpop.f32.mrb[0].mxu0
    %204 = vmatprep.mubr.f32.mxu0 0.0
    %205 = vmatmul.mubr.f32.gmra.mrb[0].mxu0 %v79
    %v206 = vpop.f32.mrb[0].mxu0
    %v207 = vadd.f32 %v62, %v206
    %v208 = vpop.f32.mrb[0].mxu0
    %209 = vmatprep.mubr.f32.mxu0 0.0
    %210 = vmatmul.mubr.f32.gmra.mrb[0].mxu0 %v82
    %v211 = vpop.f32.mrb[0].mxu0
    %v212 = vadd.f32 %v67, %v211
    %v213 = vpop.f32.mrb[0].mxu0
    %214 = vmatprep.mubr.f32.mxu0 0.0
    %215 = vmatmul.mubr.f32.gmra.mrb[0].mxu0 %v85
    %v216 = vpop.f32.mrb[0].mxu0
    %v217 = vadd.f32 %v72, %v216
    %v218 = vpop.f32.mrb[0].mxu0
    %219 = vdwg.mxu0
    %v220 = vmul.f32 %v202, 0.5
    %v221 = vmul.f32 %v207, 0.5
    %v222 = vmul.f32 %v212, 0.5
    %v223 = vmul.f32 %v217, 0.5
    %v224 = vmul.f32 %v202, 0.70710677
    %v225 = vmul.f32 %v207, 0.70710677
    %v226 = vmul.f32 %v212, 0.70710677
    %v227 = vmul.f32 %v217, 0.70710677
    %v228 = verf.f32.pop %v224
    %v229 = verf.f32.pop %v225
    %v230 = verf.f32.pop %v226
    %v231 = verf.f32.pop %v227
    %v232 = vadd.f32 %v228, 1.0
    %v233 = vadd.f32 %v229, 1.0
    %v234 = vadd.f32 %v230, 1.0
    %v235 = vadd.f32 %v231, 1.0
    %v236 = vmul.f32 %v220, %v232
    %v237 = vmul.f32 %v221, %v233
    %v238 = vmul.f32 %v222, %v234
    %v239 = vmul.f32 %v223, %v235
    %v240 = vld [vmem:[%s4] sm:$0xff]
    %v241 = vld [vmem:[%s4 + $0x8] sm:$0xff]
    %v242 = vld [vmem:[%s4 + $0x10] sm:$0xff]
    %v243 = vld [vmem:[%s4 + $0x18] sm:$0xff]
    %v244 = vld [vmem:[%s5] sm:$0xff]
    %v245 = vld [vmem:[%s5 + $0x8] sm:$0xff]
    %v246 = vld [vmem:[%s5 + $0x10] sm:$0xff]
    %v247 = vld [vmem:[%s5 + $0x18] sm:$0xff]
    %249 = vset.pattern.permute.xlu0 0
    %250 = vperm.xlu0 %249, %v244
    %v251 = vpop.permute.xlu0 %250
    %254 = vset.pattern.permute.xlu0 0
    %255 = vperm.xlu0 %254, %v245
    %v256 = vpop.permute.xlu0 %255
    %259 = vset.pattern.permute.xlu0 0
    %260 = vperm.xlu0 %259, %v246
    %v261 = vpop.permute.xlu0 %260
    %264 = vset.pattern.permute.xlu0 0
    %265 = vperm.xlu0 %264, %v247
    %v266 = vpop.permute.xlu0 %265
    %vm268 = vcmask 261120
    %v270 = vsel %vm268, %v240, 0
    %v273 = vsel %vm268, %v241, 0
    %v276 = vsel %vm268, %v242, 0
    %v279 = vsel %vm268, %v243, 0
    %281 = vmatprep.subr.mxu0 0.0
    %282 = vmatpush1.msra.mxu0 %v236
    %283 = vmatprep.subr.mxu0 0.0
    %284 = vmatpush1.msra.mxu0 %v237
    %285 = vmatprep.subr.mxu0 0.0
    %286 = vmatpush1.msra.mxu0 %v238
    %287 = vmatprep.subr.mxu0 0.0
    %288 = vmatpush1.msra.mxu0 %v239
    %289 = vmatprep.subr.mxu0 0.0
    %290 = vmatpush1.msra.mxu0 0.0
    %291 = vmatprep.subr.mxu0 0.0
    %292 = vmatpush1.msra.mxu0 0.0
    %293 = vmatprep.subr.mxu0 0.0
    %294 = vmatpush1.msra.mxu0 0.0
    %295 = vmatprep.subr.mxu0 0.0
    %296 = vmatpush1.msra.mxu0 0.0
    %297 = vmatprep.subr.mxu0 0.0
    %298 = vmatpush1.msra.mxu0 0.0
    %299 = vmatprep.subr.mxu0 0.0
    %300 = vmatpush1.msra.mxu0 0.0
    %301 = vmatprep.subr.mxu0 0.0
    %302 = vmatpush1.msra.mxu0 0.0
    %303 = vmatprep.subr.mxu0 0.0
    %304 = vmatpush1.msra.mxu0 0.0
    %305 = vmatprep.subr.mxu0 0.0
    %306 = vmatpush1.msra.mxu0 0.0
    %307 = vmatprep.subr.mxu0 0.0
    %308 = vmatpush1.msra.mxu0 0.0
    %309 = vmatprep.subr.mxu0 0.0
    %310 = vmatpush1.msra.mxu0 0.0
    %311 = vmatprep.subr.mxu0 0.0
    %312 = vmatpush1.msra.mxu0 0.0
    %313 = vmatprep.subr.mxu0 0.0
    %314 = vmatpush1.msra.mxu0 0.0
    %315 = vmatprep.subr.mxu0 0.0
    %316 = vmatpush1.msra.mxu0 0.0
    %317 = vmatprep.subr.mxu0 0.0
    %318 = vmatpush1.msra.mxu0 0.0
    %319 = vmatprep.subr.mxu0 0.0
    %320 = vmatpush1.msra.mxu0 0.0
    %321 = vmatprep.subr.mxu0 0.0
    %322 = vmatpush1.msra.mxu0 0.0
    %323 = vmatprep.subr.mxu0 0.0
    %324 = vmatpush1.msra.mxu0 0.0
    %325 = vmatprep.subr.mxu0 0.0
    %326 = vmatpush1.msra.mxu0 0.0
    %327 = vmatprep.subr.mxu0 0.0
    %328 = vmatpush1.msra.mxu0 0.0
    %329 = vmatprep.subr.mxu0 0.0
    %330 = vmatpush1.msra.mxu0 0.0
    %331 = vmatprep.subr.mxu0 0.0
    %332 = vmatpush1.msra.mxu0 0.0
    %333 = vmatprep.subr.mxu0 0.0
    %334 = vmatpush1.msra.mxu0 0.0
    %335 = vmatprep.subr.mxu0 0.0
    %336 = vmatpush1.msra.mxu0 0.0
    %337 = vmatprep.subr.mxu0 0.0
    %338 = vmatpush1.msra.mxu0 0.0
    %339 = vmatprep.subr.mxu0 0.0
    %340 = vmatpush1.msra.mxu0 0.0
    %341 = vmatprep.subr.mxu0 0.0
    %342 = vmatpush1.msra.mxu0 0.0
    %343 = vmatprep.subr.mxu0 0.0
    %344 = vmatpush1.msra.mxu0 0.0
    %345 = vmatprep.mubr.f32.mxu0 0.0
    %346 = vmatmul.mubr.f32.gmra.mrb[0].mxu0 %v270
    %v347 = vpop.f32.mrb[0].mxu0
    %v348 = vadd.f32 %v251, %v347
    %v349 = vpop.f32.mrb[0].mxu0
    %350 = vmatprep.mubr.f32.mxu0 0.0
    %351 = vmatmul.mubr.f32.gmra.mrb[0].mxu0 %v273
    %v352 = vpop.f32.mrb[0].mxu0
    %v353 = vadd.f32 %v256, %v352
    %v354 = vpop.f32.mrb[0].mxu0
    %355 = vmatprep.mubr.f32.mxu0 0.0
    %356 = vmatmul.mubr.f32.gmra.mrb[0].mxu0 %v276
    %v357 = vpop.f32.mrb[0].mxu0
    %v358 = vadd.f32 %v261, %v357
    %v359 = vpop.f32.mrb[0].mxu0
    %360 = vmatprep.mubr.f32.mxu0 0.0
    %361 = vmatmul.mubr.f32.gmra.mrb[0].mxu0 %v279
    %v362 = vpop.f32.mrb[0].mxu0
    %v363 = vadd.f32 %v266, %v362
    %v364 = vpop.f32.mrb[0].mxu0
    %365 = vdwg.mxu0
    %v366 = vmul.f32 %v348, 0.5
    %v367 = vmul.f32 %v353, 0.5
    %v368 = vmul.f32 %v358, 0.5
    %v369 = vmul.f32 %v363, 0.5
    %v370 = vmul.f32 %v348, 0.70710677
    %v371 = vmul.f32 %v353, 0.70710677
    %v372 = vmul.f32 %v358, 0.70710677
    %v373 = vmul.f32 %v363, 0.70710677
    %v374 = verf.f32.pop %v370
    %v375 = verf.f32.pop %v371
    %v376 = verf.f32.pop %v372
    %v377 = verf.f32.pop %v373
    %v378 = vadd.f32 %v374, 1.0
    %v379 = vadd.f32 %v375, 1.0
    %v380 = vadd.f32 %v376, 1.0
    %v381 = vadd.f32 %v377, 1.0
    %v382 = vmul.f32 %v366, %v378
    %v383 = vmul.f32 %v367, %v379
    %v384 = vmul.f32 %v368, %v380
    %v385 = vmul.f32 %v369, %v381
    %v386 = vld [vmem:[%s6] sm:$0xff]
    %v387 = vld [vmem:[%s6 + $0x8] sm:$0xff]
    %v388 = vld [vmem:[%s6 + $0x10] sm:$0xff]
    %v389 = vld [vmem:[%s6 + $0x18] sm:$0xff]
    %v390 = vld [vmem:[%s6 + $0x20] sm:$0xff]
    %v391 = vld [vmem:[%s6 + $0x28] sm:$0xff]
    %v392 = vld [vmem:[%s6 + $0x30] sm:$0xff]
    %v393 = vld [vmem:[%s6 + $0x38] sm:$0xff]
    %v394 = vld [vmem:[%s6 + $0x40] sm:$0xff]
    %v395 = vld [vmem:[%s6 + $0x48] sm:$0xff]
    %v396 = vld [vmem:[%s6 + $0x50] sm:$0xff]
    %v397 = vld [vmem:[%s6 + $0x58] sm:$0xff]
    %v398 = vld [vmem:[%s6 + $0x60] sm:$0xff]
    %v399 = vld [vmem:[%s6 + $0x68] sm:$0xff]
    %v400 = vld [vmem:[%s6 + $0x70] sm:$0xff]
    %v401 = vld [vmem:[%s6 + $0x78] sm:$0xff]
    %v402 = vld [vmem:[%s7] sm:$0xff]
    %v403 = vld [vmem:[%s7 + $0x8] sm:$0xff]
    %v404 = vld [vmem:[%s7 + $0x10] sm:$0xff]
    %v405 = vld [vmem:[%s7 + $0x18] sm:$0xff]
    %v406 = vld [vmem:[%s7 + $0x20] sm:$0xff]
    %v407 = vld [vmem:[%s7 + $0x28] sm:$0xff]
    %v408 = vld [vmem:[%s7 + $0x30] sm:$0xff]
    %v409 = vld [vmem:[%s7 + $0x38] sm:$0xff]
    %v410 = vld [vmem:[%s7 + $0x40] sm:$0xff]
    %v411 = vld [vmem:[%s7 + $0x48] sm:$0xff]
    %v412 = vld [vmem:[%s7 + $0x50] sm:$0xff]
    %v413 = vld [vmem:[%s7 + $0x58] sm:$0xff]
    %v414 = vld [vmem:[%s7 + $0x60] sm:$0xff]
    %v415 = vld [vmem:[%s7 + $0x68] sm:$0xff]
    %v416 = vld [vmem:[%s7 + $0x70] sm:$0xff]
    %v417 = vld [vmem:[%s7 + $0x78] sm:$0xff]
    %v418 = vld [vmem:[%s1] sm:$0x1]
    %v419 = vlaneseq
    %v420 = vshrl.u32 %v419, 7
    %v421 = vlaneseq
    %v422 = vshrl.u32 %v421, 7
    %v423 = vsub.s32 0, %v422
    %v424 = vrot.slane %v418, %v423
    %vm425 = vcmp.eq.s32.totalorder %v420, %v424
    %v426 = vsel %vm425, 1, 0
    %v427 = vcvt.s32.f32 %v426
    %vm428 = vcmask 31744
    %v430 = vsel %vm428, %v402, 0
    %v433 = vsel %vm428, %v403, 0
    %v436 = vsel %vm428, %v404, 0
    %v439 = vsel %vm428, %v405, 0
    %v442 = vsel %vm428, %v406, 0
    %v445 = vsel %vm428, %v407, 0
    %v448 = vsel %vm428, %v408, 0
    %v451 = vsel %vm428, %v409, 0
    %v454 = vsel %vm428, %v410, 0
    %v457 = vsel %vm428, %v411, 0
    %v460 = vsel %vm428, %v412, 0
    %v463 = vsel %vm428, %v413, 0
    %v466 = vsel %vm428, %v414, 0
    %v469 = vsel %vm428, %v415, 0
    %v472 = vsel %vm428, %v416, 0
    %v475 = vsel %vm428, %v417, 0
    %vm477 = vcmask 1043456
    %v479 = vsel %vm477, %v427, 0
    %481 = vmatprep.subr.mxu0 0.0
    %482 = vmatpush1.msra.mxu0 %v479
    %483 = vmatprep.subr.mxu0 0.0
    %484 = vmatpush1.msra.mxu0 0.0
    %485 = vmatprep.subr.mxu0 0.0
    %486 = vmatpush1.msra.mxu0 0.0
    %487 = vmatprep.subr.mxu0 0.0
    %488 = vmatpush1.msra.mxu0 0.0
    %489 = vmatprep.subr.mxu0 0.0
    %490 = vmatpush1.msra.mxu0 0.0
    %491 = vmatprep.subr.mxu0 0.0
    %492 = vmatpush1.msra.mxu0 0.0
    %493 = vmatprep.subr.mxu0 0.0
    %494 = vmatpush1.msra.mxu0 0.0
    %495 = vmatprep.subr.mxu0 0.0
    %496 = vmatpush1.msra.mxu0 0.0
    %497 = vmatprep.subr.mxu0 0.0
    %498 = vmatpush1.msra.mxu0 0.0
    %499 = vmatprep.subr.mxu0 0.0
    %500 = vmatpush1.msra.mxu0 0.0
    %501 = vmatprep.subr.mxu0 0.0
    %502 = vmatpush1.msra.mxu0 0.0
    %503 = vmatprep.subr.mxu0 0.0
    %504 = vmatpush1.msra.mxu0 0.0
    %505 = vmatprep.subr.mxu0 0.0
    %506 = vmatpush1.msra.mxu0 0.0
    %507 = vmatprep.subr.mxu0 0.0
    %508 = vmatpush1.msra.mxu0 0.0
    %509 = vmatprep.subr.mxu0 0.0
    %510 = vmatpush1.msra.mxu0 0.0
    %511 = vmatprep.subr.mxu0 0.0
    %512 = vmatpush1.msra.mxu0 0.0
    %513 = vmatprep.subr.mxu0 0.0
    %514 = vmatpush1.msra.mxu0 0.0
    %515 = vmatprep.subr.mxu0 0.0
    %516 = vmatpush1.msra.mxu0 0.0
    %517 = vmatprep.subr.mxu0 0.0
    %518 = vmatpush1.msra.mxu0 0.0
    %519 = vmatprep.subr.mxu0 0.0
    %520 = vmatpush1.msra.mxu0 0.0
    %521 = vmatprep.subr.mxu0 0.0
    %522 = vmatpush1.msra.mxu0 0.0
    %523 = vmatprep.subr.mxu0 0.0
    %524 = vmatpush1.msra.mxu0 0.0
    %525 = vmatprep.subr.mxu0 0.0
    %526 = vmatpush1.msra.mxu0 0.0
    %527 = vmatprep.subr.mxu0 0.0
    %528 = vmatpush1.msra.mxu0 0.0
    %529 = vmatprep.subr.mxu0 0.0
    %530 = vmatpush1.msra.mxu0 0.0
    %531 = vmatprep.subr.mxu0 0.0
    %532 = vmatpush1.msra.mxu0 0.0
    %533 = vmatprep.subr.mxu0 0.0
    %534 = vmatpush1.msra.mxu0 0.0
    %535 = vmatprep.subr.mxu0 0.0
    %536 = vmatpush1.msra.mxu0 0.0
    %537 = vmatprep.subr.mxu0 0.0
    %538 = vmatpush1.msra.mxu0 0.0
    %539 = vmatprep.subr.mxu0 0.0
    %540 = vmatpush1.msra.mxu0 0.0
    %541 = vmatprep.subr.mxu0 0.0
    %542 = vmatpush1.msra.mxu0 0.0
    %543 = vmatprep.subr.mxu0 0.0
    %544 = vmatpush1.msra.mxu0 0.0
    %545 = vmatprep.mubr.f32.mxu0 0.0
    %546 = vmatmul.mubr.f32.gmra.mrb[0].mxu0 %v430
    %v547 = vpop.f32.mrb[0].mxu0
    %v548 = vadd.f32 0.0, %v547
    %v549 = vpop.f32.mrb[0].mxu0
    %550 = vmatprep.mubr.f32.mxu0 0.0
    %551 = vmatmul.mubr.f32.gmra.mrb[0].mxu0 %v433
    %v552 = vpop.f32.mrb[0].mxu0
    %v553 = vadd.f32 0.0, %v552
    %v554 = vpop.f32.mrb[0].mxu0
    %555 = vmatprep.mubr.f32.mxu0 0.0
    %556 = vmatmul.mubr.f32.gmra.mrb[0].mxu0 %v436
    %v557 = vpop.f32.mrb[0].mxu0
    %v558 = vadd.f32 0.0, %v557
    %v559 = vpop.f32.mrb[0].mxu0
    %560 = vmatprep.mubr.f32.mxu0 0.0
    %561 = vmatmul.mubr.f32.gmra.mrb[0].mxu0 %v439
    %v562 = vpop.f32.mrb[0].mxu0
    %v563 = vadd.f32 0.0, %v562
    %v564 = vpop.f32.mrb[0].mxu0
    %565 = vmatprep.mubr.f32.mxu0 0.0
    %566 = vmatmul.mubr.f32.gmra.mrb[0].mxu0 %v442
    %v567 = vpop.f32.mrb[0].mxu0
    %v568 = vadd.f32 0.0, %v567
    %v569 = vpop.f32.mrb[0].mxu0
    %570 = vmatprep.mubr.f32.mxu0 0.0
    %571 = vmatmul.mubr.f32.gmra.mrb[0].mxu0 %v445
    %v572 = vpop.f32.mrb[0].mxu0
    %v573 = vadd.f32 0.0, %v572
    %v574 = vpop.f32.mrb[0].mxu0
    %575 = vmatprep.mubr.f32.mxu0 0.0
    %576 = vmatmul.mubr.f32.gmra.mrb[0].mxu0 %v448
    %v577 = vpop.f32.mrb[0].mxu0
    %v578 = vadd.f32 0.0, %v577
    %v579 = vpop.f32.mrb[0].mxu0
    %580 = vmatprep.mubr.f32.mxu0 0.0
    %581 = vmatmul.mubr.f32.gmra.mrb[0].mxu0 %v451
    %v582 = vpop.f32.mrb[0].mxu0
    %v583 = vadd.f32 0.0, %v582
    %v584 = vpop.f32.mrb[0].mxu0
    %585 = vmatprep.mubr.f32.mxu0 0.0
    %586 = vmatmul.mubr.f32.gmra.mrb[0].mxu0 %v454
    %v587 = vpop.f32.mrb[0].mxu0
    %v588 = vadd.f32 0.0, %v587
    %v589 = vpop.f32.mrb[0].mxu0
    %590 = vmatprep.mubr.f32.mxu0 0.0
    %591 = vmatmul.mubr.f32.gmra.mrb[0].mxu0 %v457
    %v592 = vpop.f32.mrb[0].mxu0
    %v593 = vadd.f32 0.0, %v592
    %v594 = vpop.f32.mrb[0].mxu0
    %595 = vmatprep.mubr.f32.mxu0 0.0
    %596 = vmatmul.mubr.f32.gmra.mrb[0].mxu0 %v460
    %v597 = vpop.f32.mrb[0].mxu0
    %v598 = vadd.f32 0.0, %v597
    %v599 = vpop.f32.mrb[0].mxu0
    %600 = vmatprep.mubr.f32.mxu0 0.0
    %601 = vmatmul.mubr.f32.gmra.mrb[0].mxu0 %v463
    %v602 = vpop.f32.mrb[0].mxu0
    %v603 = vadd.f32 0.0, %v602
    %v604 = vpop.f32.mrb[0].mxu0
    %605 = vmatprep.mubr.f32.mxu0 0.0
    %606 = vmatmul.mubr.f32.gmra.mrb[0].mxu0 %v466
    %v607 = vpop.f32.mrb[0].mxu0
    %v608 = vadd.f32 0.0, %v607
    %v609 = vpop.f32.mrb[0].mxu0
    %610 = vmatprep.mubr.f32.mxu0 0.0
    %611 = vmatmul.mubr.f32.gmra.mrb[0].mxu0 %v469
    %v612 = vpop.f32.mrb[0].mxu0
    %v613 = vadd.f32 0.0, %v612
    %v614 = vpop.f32.mrb[0].mxu0
    %615 = vmatprep.mubr.f32.mxu0 0.0
    %616 = vmatmul.mubr.f32.gmra.mrb[0].mxu0 %v472
    %v617 = vpop.f32.mrb[0].mxu0
    %v618 = vadd.f32 0.0, %v617
    %v619 = vpop.f32.mrb[0].mxu0
    %620 = vmatprep.mubr.f32.mxu0 0.0
    %621 = vmatmul.mubr.f32.gmra.mrb[0].mxu0 %v475
    %v622 = vpop.f32.mrb[0].mxu0
    %v623 = vadd.f32 0.0, %v622
    %v624 = vpop.f32.mrb[0].mxu0
    %625 = vdwg.mxu0
    %v627 = vsel %vm268, %v386, 0
    %v630 = vsel %vm268, %v387, 0
    %v633 = vsel %vm268, %v388, 0
    %v636 = vsel %vm268, %v389, 0
    %v639 = vsel %vm268, %v390, 0
    %v642 = vsel %vm268, %v391, 0
    %v645 = vsel %vm268, %v392, 0
    %v648 = vsel %vm268, %v393, 0
    %v651 = vsel %vm268, %v394, 0
    %v654 = vsel %vm268, %v395, 0
    %v657 = vsel %vm268, %v396, 0
    %v660 = vsel %vm268, %v397, 0
    %v663 = vsel %vm268, %v398, 0
    %v666 = vsel %vm268, %v399, 0
    %v669 = vsel %vm268, %v400, 0
    %v672 = vsel %vm268, %v401, 0
    %674 = vmatprep.subr.mxu0 0.0
    %675 = vmatpush1.msra.mxu0 %v382
    %676 = vmatprep.subr.mxu0 0.0
    %677 = vmatpush1.msra.mxu0 %v383
    %678 = vmatprep.subr.mxu0 0.0
    %679 = vmatpush1.msra.mxu0 %v384
    %680 = vmatprep.subr.mxu0 0.0
    %681 = vmatpush1.msra.mxu0 %v385
    %682 = vmatprep.subr.mxu0 0.0
    %683 = vmatpush1.msra.mxu0 0.0
    %684 = vmatprep.subr.mxu0 0.0
    %685 = vmatpush1.msra.mxu0 0.0
    %686 = vmatprep.subr.mxu0 0.0
    %687 = vmatpush1.msra.mxu0 0.0
    %688 = vmatprep.subr.mxu0 0.0
    %689 = vmatpush1.msra.mxu0 0.0
    %690 = vmatprep.subr.mxu0 0.0
    %691 = vmatpush1.msra.mxu0 0.0
    %692 = vmatprep.subr.mxu0 0.0
    %693 = vmatpush1.msra.mxu0 0.0
    %694 = vmatprep.subr.mxu0 0.0
    %695 = vmatpush1.msra.mxu0 0.0
    %696 = vmatprep.subr.mxu0 0.0
    %697 = vmatpush1.msra.mxu0 0.0
    %698 = vmatprep.subr.mxu0 0.0
    %699 = vmatpush1.msra.mxu0 0.0
    %700 = vmatprep.subr.mxu0 0.0
    %701 = vmatpush1.msra.mxu0 0.0
    %702 = vmatprep.subr.mxu0 0.0
    %703 = vmatpush1.msra.mxu0 0.0
    %704 = vmatprep.subr.mxu0 0.0
    %705 = vmatpush1.msra.mxu0 0.0
    %706 = vmatprep.subr.mxu0 0.0
    %707 = vmatpush1.msra.mxu0 0.0
    %708 = vmatprep.subr.mxu0 0.0
    %709 = vmatpush1.msra.mxu0 0.0
    %710 = vmatprep.subr.mxu0 0.0
    %711 = vmatpush1.msra.mxu0 0.0
    %712 = vmatprep.subr.mxu0 0.0
    %713 = vmatpush1.msra.mxu0 0.0
    %714 = vmatprep.subr.mxu0 0.0
    %715 = vmatpush1.msra.mxu0 0.0
    %716 = vmatprep.subr.mxu0 0.0
    %717 = vmatpush1.msra.mxu0 0.0
    %718 = vmatprep.subr.mxu0 0.0
    %719 = vmatpush1.msra.mxu0 0.0
    %720 = vmatprep.subr.mxu0 0.0
    %721 = vmatpush1.msra.mxu0 0.0
    %722 = vmatprep.subr.mxu0 0.0
    %723 = vmatpush1.msra.mxu0 0.0
    %724 = vmatprep.subr.mxu0 0.0
    %725 = vmatpush1.msra.mxu0 0.0
    %726 = vmatprep.subr.mxu0 0.0
    %727 = vmatpush1.msra.mxu0 0.0
    %728 = vmatprep.subr.mxu0 0.0
    %729 = vmatpush1.msra.mxu0 0.0
    %730 = vmatprep.subr.mxu0 0.0
    %731 = vmatpush1.msra.mxu0 0.0
    %732 = vmatprep.subr.mxu0 0.0
    %733 = vmatpush1.msra.mxu0 0.0
    %734 = vmatprep.subr.mxu0 0.0
    %735 = vmatpush1.msra.mxu0 0.0
    %736 = vmatprep.subr.mxu0 0.0
    %737 = vmatpush1.msra.mxu0 0.0
    %738 = vmatprep.mubr.f32.mxu0 0.0
    %739 = vmatmul.mubr.f32.gmra.mrb[0].mxu0 %v627
    %v740 = vpop.f32.mrb[0].mxu0
    %v741 = vadd.f32 %v548, %v740
    %v742 = vpop.f32.mrb[0].mxu0
    %743 = vmatprep.mubr.f32.mxu0 0.0
    %744 = vmatmul.mubr.f32.gmra.mrb[0].mxu0 %v630
    %v745 = vpop.f32.mrb[0].mxu0
    %v746 = vadd.f32 %v553, %v745
    %v747 = vpop.f32.mrb[0].mxu0
    %748 = vmatprep.mubr.f32.mxu0 0.0
    %749 = vmatmul.mubr.f32.gmra.mrb[0].mxu0 %v633
    %v750 = vpop.f32.mrb[0].mxu0
    %v751 = vadd.f32 %v558, %v750
    %v752 = vpop.f32.mrb[0].mxu0
    %753 = vmatprep.mubr.f32.mxu0 0.0
    %754 = vmatmul.mubr.f32.gmra.mrb[0].mxu0 %v636
    %v755 = vpop.f32.mrb[0].mxu0
    %v756 = vadd.f32 %v563, %v755
    %v757 = vpop.f32.mrb[0].mxu0
    %758 = vmatprep.mubr.f32.mxu0 0.0
    %759 = vmatmul.mubr.f32.gmra.mrb[0].mxu0 %v639
    %v760 = vpop.f32.mrb[0].mxu0
    %v761 = vadd.f32 %v568, %v760
    %v762 = vpop.f32.mrb[0].mxu0
    %763 = vmatprep.mubr.f32.mxu0 0.0
    %764 = vmatmul.mubr.f32.gmra.mrb[0].mxu0 %v642
    %v765 = vpop.f32.mrb[0].mxu0
    %v766 = vadd.f32 %v573, %v765
    %v767 = vpop.f32.mrb[0].mxu0
    %768 = vmatprep.mubr.f32.mxu0 0.0
    %769 = vmatmul.mubr.f32.gmra.mrb[0].mxu0 %v645
    %v770 = vpop.f32.mrb[0].mxu0
    %v771 = vadd.f32 %v578, %v770
    %v772 = vpop.f32.mrb[0].mxu0
    %773 = vmatprep.mubr.f32.mxu0 0.0
    %774 = vmatmul.mubr.f32.gmra.mrb[0].mxu0 %v648
    %v775 = vpop.f32.mrb[0].mxu0
    %v776 = vadd.f32 %v583, %v775
    %v777 = vpop.f32.mrb[0].mxu0
    %778 = vmatprep.mubr.f32.mxu0 0.0
    %779 = vmatmul.mubr.f32.gmra.mrb[0].mxu0 %v651
    %v780 = vpop.f32.mrb[0].mxu0
    %v781 = vadd.f32 %v588, %v780
    %v782 = vpop.f32.mrb[0].mxu0
    %783 = vmatprep.mubr.f32.mxu0 0.0
    %784 = vmatmul.mubr.f32.gmra.mrb[0].mxu0 %v654
    %v785 = vpop.f32.mrb[0].mxu0
    %v786 = vadd.f32 %v593, %v785
    %v787 = vpop.f32.mrb[0].mxu0
    %788 = vmatprep.mubr.f32.mxu0 0.0
    %789 = vmatmul.mubr.f32.gmra.mrb[0].mxu0 %v657
    %v790 = vpop.f32.mrb[0].mxu0
    %v791 = vadd.f32 %v598, %v790
    %v792 = vpop.f32.mrb[0].mxu0
    %793 = vmatprep.mubr.f32.mxu0 0.0
    %794 = vmatmul.mubr.f32.gmra.mrb[0].mxu0 %v660
    %v795 = vpop.f32.mrb[0].mxu0
    %v796 = vadd.f32 %v603, %v795
    %v797 = vpop.f32.mrb[0].mxu0
    %798 = vmatprep.mubr.f32.mxu0 0.0
    %799 = vmatmul.mubr.f32.gmra.mrb[0].mxu0 %v663
    %v800 = vpop.f32.mrb[0].mxu0
    %v801 = vadd.f32 %v608, %v800
    %v802 = vpop.f32.mrb[0].mxu0
    %803 = vmatprep.mubr.f32.mxu0 0.0
    %804 = vmatmul.mubr.f32.gmra.mrb[0].mxu0 %v666
    %v805 = vpop.f32.mrb[0].mxu0
    %v806 = vadd.f32 %v613, %v805
    %v807 = vpop.f32.mrb[0].mxu0
    %808 = vmatprep.mubr.f32.mxu0 0.0
    %809 = vmatmul.mubr.f32.gmra.mrb[0].mxu0 %v669
    %v810 = vpop.f32.mrb[0].mxu0
    %v811 = vadd.f32 %v618, %v810
    %v812 = vpop.f32.mrb[0].mxu0
    %813 = vmatprep.mubr.f32.mxu0 0.0
    %814 = vmatmul.mubr.f32.gmra.mrb[0].mxu0 %v672
    %v815 = vpop.f32.mrb[0].mxu0
    %v816 = vadd.f32 %v623, %v815
    %v817 = vpop.f32.mrb[0].mxu0
    %818 = vdwg.mxu0
    %819 = vxpose.xlu0.b32.start [1/16] %v741, 128
    %820 = vxpose.xlu0.b32.cont [2/16] %v746, 128
    %821 = vxpose.xlu0.b32.cont [3/16] %v751, 128
    %822 = vxpose.xlu0.b32.cont [4/16] %v756, 128
    %823 = vxpose.xlu0.b32.cont [5/16] %v761, 128
    %824 = vxpose.xlu0.b32.cont [6/16] %v766, 128
    %825 = vxpose.xlu0.b32.cont [7/16] %v771, 128
    %826 = vxpose.xlu0.b32.cont [8/16] %v776, 128
    %827 = vxpose.xlu0.b32.cont [9/16] %v781, 128
    %828 = vxpose.xlu0.b32.cont [10/16] %v786, 128
    %829 = vxpose.xlu0.b32.cont [11/16] %v791, 128
    %830 = vxpose.xlu0.b32.cont [12/16] %v796, 128
    %831 = vxpose.xlu0.b32.cont [13/16] %v801, 128
    %832 = vxpose.xlu0.b32.cont [14/16] %v806, 128
    %833 = vxpose.xlu0.b32.cont [15/16] %v811, 128
    %834 = vxpose.xlu0.b32.end [16/16] %v816, 128
    %v835 = vpop.trf.xlu0
    %v836 = vpop.trf.xlu0
    %v837 = vpop.trf.xlu0
    %v838 = vpop.trf.xlu0
    %v839 = vpop.trf.xlu0
    %v840 = vpop.trf.xlu0
    %v841 = vpop.trf.xlu0
    %v842 = vpop.trf.xlu0
    %v843 = vpop.trf.xlu0
    %v844 = vpop.trf.xlu0
    %v845 = vpop.trf.xlu0
    %v846 = vpop.trf.xlu0
    %v847 = vpop.trf.xlu0
    %v848 = vpop.trf.xlu0
    %v849 = vpop.trf.xlu0
    %v850 = vpop.trf.xlu0
    %851 = vst.msk [vmem:[#allocation2] sm:$0xff] %vm268, %v835
    %852 = vst.msk [vmem:[#allocation2 + $0x8] sm:$0xff] %vm268, %v836
    %853 = vst.msk [vmem:[#allocation2 + $0x10] sm:$0xff] %vm268, %v837
    %854 = vst.msk [vmem:[#allocation2 + $0x18] sm:$0xff] %vm268, %v838
    %855 = vst.msk [vmem:[#allocation2 + $0x20] sm:$0xff] %vm268, %v839
    %856 = vst.msk [vmem:[#allocation2 + $0x28] sm:$0xff] %vm268, %v840
    %857 = vst.msk [vmem:[#allocation2 + $0x30] sm:$0xff] %vm268, %v841
    %858 = vst.msk [vmem:[#allocation2 + $0x38] sm:$0xff] %vm268, %v842
    %859 = vst.msk [vmem:[#allocation2 + $0x40] sm:$0xff] %vm268, %v843
    %860 = vst.msk [vmem:[#allocation2 + $0x48] sm:$0xff] %vm268, %v844
    %861 = vst.msk [vmem:[#allocation2 + $0x50] sm:$0xff] %vm268, %v845
    %862 = vst.msk [vmem:[#allocation2 + $0x58] sm:$0xff] %vm268, %v846
    %863 = vst.msk [vmem:[#allocation2 + $0x60] sm:$0xff] %vm268, %v847
    %864 = vst.msk [vmem:[#allocation2 + $0x68] sm:$0xff] %vm268, %v848
    %865 = vst.msk [vmem:[#allocation2 + $0x70] sm:$0xff] %vm268, %v849
    %866 = vst.msk [vmem:[#allocation2 + $0x78] sm:$0xff] %vm268, %v850
    // Predicated region
    $region34: #{tpu_custom_call.1} parent=1 // pred_check
      _
    $region35: #{tpu_custom_call.1} parent=1 // pred_check_branch
      %868 = sbr.rel (0) target = $region37
    $region36: #{tpu_custom_call.1} parent=1 // pred_region
      %s870 = ssub.s32 2048, 512
      %871 = vsyncadd [#allocation3], %s870
      %s872 = sshll.u32 [#allocation2], 4
      %s873 = int_to_ptr.vmem [resolvable:$true] %s872
      %878 = dma.vmem_to_hbm [thread:$0]  %s873, 512, %s8, [#allocation3], 128, 128, 8
    $region37: #{tpu_custom_call.1} parent=1 // pred_fallthru
      _
    // Predicated region
    $region38: #{tpu_custom_call.1} parent=1 // pred_check
      _
    $region39: #{tpu_custom_call.1} parent=1 // pred_check_branch
      %880 = sbr.rel (0) target = $region41
    $region40: #{tpu_custom_call.1} parent=1 // pred_region
      %881 = dma.done [#allocation3], 2048
    $region41: #{tpu_custom_call.1} parent=1 // pred_fallthru
      _
    %882 = vsyncpa [#allocation3], 1

</llo_original>
